<compile_context>
chip_gen: v5e
topology: v5e:2x2
jax: 0.10.0
libtpu: 0.0.40
codegen_flags: <defaults>
</compile_context>

<pallas_src>
import functools

import jax
import jax.numpy as jnp
import numpy as np
from jax.experimental import pallas as pl
from jax.experimental.pallas import tpu as pltpu

# Module hyper-parameters (CombinedLoss.__init__ defaults; alpha=None -> no
# per-class weights, so no learnable parameters).
GAMMA = 2.0            # gamma == 2 gets an explicit-square fast path below
LABEL_SMOOTHING = 0.1
KL_WEIGHT = 0.1

_LANE = 128


def _combined_loss_kernel(logits_ref, tgt_ref, out_ref, *, n_total):
    i = pl.program_id(0)
    x = logits_ref[...].astype(jnp.float32)      # (TILE_N, C) logits (f32)
    t = tgt_ref[...]                             # (TILE_N, 1) int32 labels
    tn, c = x.shape                              # tile rows, global C (C untiled)

    # Ragged last tile: only sanitize the tiny targets block (garbage class
    # ids could make log(st) misbehave); logits garbage stays confined to
    # padded rows because every reduction below is per-row (axis=1), and the
    # final jnp.where row mask zeroes those rows (where, not *mask, so 0*NaN
    # cannot leak through).
    row = jax.lax.broadcasted_iota(jnp.int32, (tn, 1), 0)
    valid = (i * tn + row) < n_total             # (TILE_N, 1) bool
    t = jnp.where(valid, t, 0)

    # ---- log p(target) without materializing the full (TILE_N, C) log-softmax ----
    m = jnp.max(x, axis=1, keepdims=True)                           # (TILE_N, 1)
    lse = jnp.log(jnp.sum(jnp.exp(x - m), axis=1, keepdims=True))   # (TILE_N, 1)
    col = jax.lax.broadcasted_iota(jnp.int32, (tn, c), 1)
    # Fused masked gather of the target logit (no f32 one-hot materialized).
    x_t = jnp.sum(jnp.where(col == t, x, 0.0), axis=1, keepdims=True)
    lsm_t = (x_t - m) - lse                                         # log p_t

    # ---- focal loss: ce = -log p_t; pt = p_t; (1-pt)^gamma * ce ----
    ce = -lsm_t
    pt = jnp.exp(lsm_t)
    omp = jnp.maximum(1.0 - pt, 0.0)             # clamp: pt may round to >1
    if GAMMA == 2.0:
        mod = omp * omp                          # fast path, no EUP pow
    else:
        mod = jnp.power(omp, GAMMA)
    focal = mod * ce                             # (TILE_N, 1)

    # ---- "smoothed target" KL term, faithful to the PyTorch module:
    # st_i = label_i * (1 - ls) + ls / C   (per-sample scalar)
    # kl_div(log_softmax(x), one_hot * st[:,None], 'batchmean')
    #   -> per-row contribution st_i * (log(st_i) - log p_t_i); zero-target
    #      entries contribute 0 (xlogy convention). Mean over N in wrapper. ----
    st = t.astype(jnp.float32) * (1.0 - LABEL_SMOOTHING) + LABEL_SMOOTHING / c
    kl = st * (jnp.log(st) - lsm_t)              # (TILE_N, 1)

    # Row mask with where (NaN-proof), then per-tile partial sums.
    focal = jnp.where(valid, focal, 0.0)
    kl = jnp.where(valid, kl, 0.0)
    focal_sum = jnp.sum(focal)
    kl_sum = jnp.sum(kl)

    # Lane-dense (1,1,128) output block: focal in lane 0, kl in lane 1.
    lane = jax.lax.broadcasted_iota(jnp.int32, (1, 1, _LANE), 2)
    out_ref[...] = jnp.where(lane == 0, focal_sum,
                             jnp.where(lane == 1, kl_sum, 0.0))


def _round_up(v, m):
    return ((v + m - 1) // m) * m


def _vmem_capacity_bytes():
    """Physical VMEM of the attached chip; conservative fallback (v7x = 64 MiB)."""
    try:
        return int(pltpu.get_tpu_info().vmem_capacity_bytes)
    except Exception:
        return 64 * 1024 * 1024


def _pick_tile_and_vmem(n, c, itemsize):
    """Dtype/temporary-aware row-tile size and scoped-VMEM limit.

    Budget covers: 2x double-buffered native-dtype input rows, the f32 upcast
    copy, ~2 (TILE_N,C) f32 elementwise temporaries, and the (TILE_N,1) int32
    targets block padded to 128 lanes (x2 buffers).
    """
    vmem_cap = _vmem_capacity_bytes()
    # ~96 MiB scoped limit on 128 MiB chips (v5e/v6e), ~48 MiB on v7x (64 MiB).
    vmem_limit = int(max(32 * 1024 * 1024,
                         min((vmem_cap * 3) // 4, 96 * 1024 * 1024)))
    work_budget = (vmem_limit * 3) // 4          # headroom for compiler scratch

    bytes_per_row = 2 * c * itemsize + 3 * c * 4 + 2 * _LANE * 4
    align = max(8, 32 // max(1, int(itemsize)))  # f32: 8, bf16: 16, int8/fp8: 32

    rows = (work_budget // bytes_per_row // align) * align
    rows = max(align, min(rows, 32 * 1024))      # bytes-bounded, no 1024 cap

    tile_n = n if rows >= n else rows            # single full-array block if it fits

    # Ensure >= 2 (ideally >= 8) tiles when N permits, so a "parallel" grid
    # axis can be sharded across v7x's two TensorCores (neutral on v5e/v6e).
    if n >= 8 * align:
        target_tiles = 8
    elif n >= 2 * align:
        target_tiles = 2
    else:
        target_tiles = 1
    if target_tiles > 1:
        max_tile = _round_up(pl.cdiv(n, target_tiles), align)
        tile_n = max(align, min(tile_n, max_tile))

    return tile_n, vmem_limit


def combined_loss(logits, targets, *, tile_n=None):
    """logits: (N, C) float (f32 or bf16), targets: (N,) int -> scalar f32 loss."""
    n, c = logits.shape
    tgt2d = targets.astype(jnp.int32).reshape(n, 1)
    itemsize = jnp.dtype(logits.dtype).itemsize
    auto_tile, vmem_limit = _pick_tile_and_vmem(n, c, itemsize)
    if tile_n is None:
        tile_n = auto_tile
    grid_n = pl.cdiv(n, tile_n)

    kernel = functools.partial(_combined_loss_kernel, n_total=n)
    partials = pl.pallas_call(
        kernel,
        out_shape=jax.ShapeDtypeStruct((grid_n, 1, _LANE), jnp.float32),
        grid_spec=pltpu.PrefetchScalarGridSpec(
            num_scalar_prefetch=0,
            grid=(grid_n,),
            in_specs=[
                pl.BlockSpec((tile_n, c), lambda i: (i, 0)),
                pl.BlockSpec((tile_n, 1), lambda i: (i, 0)),
            ],
            out_specs=pl.BlockSpec((1, 1, _LANE), lambda i: (i, 0, 0)),
        ),
        compiler_params=pltpu.CompilerParams(
            dimension_semantics=("parallel",),   # per-tile partials -> TC-shardable
            vmem_limit_bytes=vmem_limit,
        ),
    )(logits, tgt2d)

    partials = partials.reshape(grid_n, _LANE)
    focal_total = jnp.sum(partials[:, 0])
    kl_total = jnp.sum(partials[:, 1])
    inv_n = 1.0 / n                              # true global N, not tile size
    return focal_total * inv_n + KL_WEIGHT * (kl_total * inv_n)


def combined_loss_ref(logits, targets):
    """Pure-JAX reference mirroring the PyTorch forward."""
    c = logits.shape[1]
    lsm = jax.nn.log_softmax(logits.astype(jnp.float32), axis=1)
    lsm_t = jnp.take_along_axis(lsm, targets[:, None], axis=1)[:, 0]
    ce = -lsm_t
    pt = jnp.exp(-ce)
    focal = (1.0 - pt) ** GAMMA * ce
    st = targets.astype(jnp.float32) * (1.0 - LABEL_SMOOTHING) + LABEL_SMOOTHING / c
    kl = st * (jnp.log(st) - lsm_t)
    return jnp.mean(focal) + KL_WEIGHT * jnp.mean(kl)


if __name__ == "__main__":
    key = jax.random.PRNGKey(0)
    k1, k2, k3, k4, k5, k6 = jax.random.split(key, 6)

    # Case 1: small shapes, auto tile (single block or tiny split).
    N1, C1 = 8, 32
    logits1 = jax.random.normal(k1, (N1, C1), dtype=jnp.float32) * 2.0
    targets1 = jax.random.randint(k2, (N1,), 0, C1, dtype=jnp.int32)
    loss1 = combined_loss(logits1, targets1)
    jax.block_until_ready(loss1)
    ref1 = combined_loss_ref(logits1, targets1)
    assert np.allclose(np.asarray(loss1), np.asarray(ref1), rtol=1e-5, atol=1e-5), (
        f"mismatch (case 1): kernel={float(loss1)} ref={float(ref1)}"
    )

    # Case 2: forces grid > 1 with a ragged last tile (exercises mask + partials).
    N2, C2 = 20, 64
    logits2 = jax.random.normal(k3, (N2, C2), dtype=jnp.float32) * 2.0
    targets2 = jax.random.randint(k4, (N2,), 0, C2, dtype=jnp.int32)
    loss2 = combined_loss(logits2, targets2, tile_n=8)
    jax.block_until_ready(loss2)
    ref2 = combined_loss_ref(logits2, targets2)
    assert np.allclose(np.asarray(loss2), np.asarray(ref2), rtol=1e-5, atol=1e-5), (
        f"mismatch (case 2): kernel={float(loss2)} ref={float(ref2)}"
    )

    # Case 3: bf16 inputs + auto tiling (dtype-aware align=16, grid>1, ragged tail).
    N3, C3 = 300, 128
    logits3 = (jax.random.normal(k5, (N3, C3), dtype=jnp.float32) * 2.0).astype(jnp.bfloat16)
    targets3 = jax.random.randint(k6, (N3,), 0, C3, dtype=jnp.int32)
    loss3 = combined_loss(logits3, targets3)
    jax.block_until_ready(loss3)
    ref3 = combined_loss_ref(logits3, targets3)
    assert np.allclose(np.asarray(loss3), np.asarray(ref3), rtol=1e-4, atol=1e-5), (
        f"mismatch (case 3): kernel={float(loss3)} ref={float(ref3)}"
    )

    print("KERNEL_OK")
</pallas_src>

<mosaic_0001>
module attributes {stable_mosaic.version = 11 : i64} {
  func.func @_combined_loss_kernel(%arg0: i32, %arg1: memref<8x32xf32, #tpu.memory_space<vmem>>, %arg2: memref<8x1xi32, #tpu.memory_space<vmem>>, %arg3: memref<1x1x128xf32, #tpu.memory_space<vmem>>) attributes {dimension_semantics = [#tpu.dimension_semantics<parallel>], iteration_bounds = array<i64: 1>, scalar_prefetch = 0 : i64, scratch_operands = 0 : i64, tpu.core_type = #tpu.core_type<tc>, window_params = [{transform_indices = @transform_0, window_bounds = array<i64: 8, 32>}, {transform_indices = @transform_1, window_bounds = array<i64: 8, 1>}, {transform_indices = @transform_2, window_bounds = array<i64: 1, 1, 128>}]} {
    %c0 = arith.constant 0 : index
    %c0_0 = arith.constant 0 : index
    %0 = vector.load %arg1[%c0, %c0_0] : memref<8x32xf32, #tpu.memory_space<vmem>>, vector<8x32xf32>
    %c0_1 = arith.constant 0 : index
    %c0_2 = arith.constant 0 : index
    %1 = vector.load %arg2[%c0_1, %c0_2] : memref<8x1xi32, #tpu.memory_space<vmem>>, vector<8x1xi32>
    %2 = tpu.iota {dimensions = array<i32: 0>} : vector<8x1xi32>
    %c8_i32 = arith.constant 8 : i32
    %3 = arith.muli %arg0, %c8_i32 : i32
    %4 = vector.broadcast %3 : i32 to vector<8x1xi32>
    %5 = arith.addi %4, %2 : vector<8x1xi32>
    %c8_i32_3 = arith.constant 8 : i32
    %6 = vector.broadcast %c8_i32_3 : i32 to vector<8x1xi32>
    %7 = arith.cmpi slt, %5, %6 : vector<8x1xi32>
    %c0_i32 = arith.constant 0 : i32
    %8 = vector.broadcast %c0_i32 : i32 to vector<8x1xi32>
    %9 = arith.select %7, %1, %8 : vector<8x1xi1>, vector<8x1xi32>
    %cst = arith.constant dense<0xFF800000> : vector<8xf32>
    %10 = vector.multi_reduction <maximumf>, %0, %cst [1] : vector<8x32xf32> to vector<8xf32>
    %11 = vector.shape_cast %10 : vector<8xf32> to vector<8x1xf32>
    %12 = vector.broadcast %11 : vector<8x1xf32> to vector<8x32xf32>
    %13 = arith.subf %0, %12 : vector<8x32xf32>
    %14 = math.exp %13 : vector<8x32xf32>
    %cst_4 = arith.constant dense<0.000000e+00> : vector<8xf32>
    %15 = vector.multi_reduction <add>, %14, %cst_4 [1] : vector<8x32xf32> to vector<8xf32>
    %16 = vector.shape_cast %15 : vector<8xf32> to vector<8x1xf32>
    %17 = math.log %16 : vector<8x1xf32>
    %18 = tpu.iota {dimensions = array<i32: 1>} : vector<8x32xi32>
    %19 = vector.broadcast %9 : vector<8x1xi32> to vector<8x32xi32>
    %20 = arith.cmpi eq, %18, %19 : vector<8x32xi32>
    %cst_5 = arith.constant 0.000000e+00 : f32
    %21 = vector.broadcast %cst_5 : f32 to vector<8x32xf32>
    %22 = arith.select %20, %0, %21 : vector<8x32xi1>, vector<8x32xf32>
    %cst_6 = arith.constant dense<0.000000e+00> : vector<8xf32>
    %23 = vector.multi_reduction <add>, %22, %cst_6 [1] : vector<8x32xf32> to vector<8xf32>
    %24 = vector.shape_cast %23 : vector<8xf32> to vector<8x1xf32>
    %25 = arith.subf %24, %11 : vector<8x1xf32>
    %26 = arith.subf %25, %17 : vector<8x1xf32>
    %cst_7 = arith.constant 0.000000e+00 : f32
    %27 = vector.broadcast %cst_7 : f32 to vector<8x1xf32>
    %28 = arith.subf %27, %26 : vector<8x1xf32>
    %29 = math.exp %26 : vector<8x1xf32>
    %cst_8 = arith.constant 1.000000e+00 : f32
    %30 = vector.broadcast %cst_8 : f32 to vector<8x1xf32>
    %31 = arith.subf %30, %29 : vector<8x1xf32>
    %cst_9 = arith.constant 0.000000e+00 : f32
    %32 = vector.broadcast %cst_9 : f32 to vector<8x1xf32>
    %33 = arith.maximumf %31, %32 : vector<8x1xf32>
    %34 = arith.mulf %33, %33 : vector<8x1xf32>
    %35 = arith.mulf %34, %28 : vector<8x1xf32>
    %36 = arith.sitofp %9 : vector<8x1xi32> to vector<8x1xf32>
    %cst_10 = arith.constant 0.899999976 : f32
    %37 = vector.broadcast %cst_10 : f32 to vector<8x1xf32>
    %38 = arith.mulf %36, %37 : vector<8x1xf32>
    %cst_11 = arith.constant 3.125000e-03 : f32
    %39 = vector.broadcast %cst_11 : f32 to vector<8x1xf32>
    %40 = arith.addf %38, %39 : vector<8x1xf32>
    %41 = math.log %40 : vector<8x1xf32>
    %42 = arith.subf %41, %26 : vector<8x1xf32>
    %43 = arith.mulf %40, %42 : vector<8x1xf32>
    %cst_12 = arith.constant 0.000000e+00 : f32
    %44 = vector.broadcast %cst_12 : f32 to vector<8x1xf32>
    %45 = arith.select %7, %35, %44 : vector<8x1xi1>, vector<8x1xf32>
    %cst_13 = arith.constant 0.000000e+00 : f32
    %46 = vector.broadcast %cst_13 : f32 to vector<8x1xf32>
    %47 = arith.select %7, %43, %46 : vector<8x1xi1>, vector<8x1xf32>
    %48 = vector.shape_cast %45 : vector<8x1xf32> to vector<1x8x1xf32>
    %cst_14 = arith.constant dense<0.000000e+00> : vector<1xf32>
    %49 = vector.multi_reduction <add>, %48, %cst_14 [1, 2] : vector<1x8x1xf32> to vector<1xf32>
    %50 = vector.shape_cast %49 : vector<1xf32> to vector<1x1x1xf32>
    %51 = vector.extract %50[0, 0, 0] : f32 from vector<1x1x1xf32>
    %52 = vector.shape_cast %47 : vector<8x1xf32> to vector<1x8x1xf32>
    %cst_15 = arith.constant dense<0.000000e+00> : vector<1xf32>
    %53 = vector.multi_reduction <add>, %52, %cst_15 [1, 2] : vector<1x8x1xf32> to vector<1xf32>
    %54 = vector.shape_cast %53 : vector<1xf32> to vector<1x1x1xf32>
    %55 = vector.extract %54[0, 0, 0] : f32 from vector<1x1x1xf32>
    %56 = tpu.iota {dimensions = array<i32: 2>} : vector<1x1x128xi32>
    %c0_i32_16 = arith.constant 0 : i32
    %57 = vector.broadcast %c0_i32_16 : i32 to vector<1x1x128xi32>
    %58 = arith.cmpi eq, %56, %57 : vector<1x1x128xi32>
    %c1_i32 = arith.constant 1 : i32
    %59 = vector.broadcast %c1_i32 : i32 to vector<1x1x128xi32>
    %60 = arith.cmpi eq, %56, %59 : vector<1x1x128xi32>
    %cst_17 = arith.constant 0.000000e+00 : f32
    %61 = vector.broadcast %55 : f32 to vector<1x1x128xf32>
    %62 = vector.broadcast %cst_17 : f32 to vector<1x1x128xf32>
    %63 = arith.select %60, %61, %62 : vector<1x1x128xi1>, vector<1x1x128xf32>
    %64 = vector.broadcast %51 : f32 to vector<1x1x128xf32>
    %65 = arith.select %58, %64, %63 : vector<1x1x128xi1>, vector<1x1x128xf32>
    %c0_18 = arith.constant 0 : index
    %c0_19 = arith.constant 0 : index
    %c0_20 = arith.constant 0 : index
    %66 = vector.load %arg3[%c0_18, %c0_19, %c0_20] : memref<1x1x128xf32, #tpu.memory_space<vmem>>, vector<1x1x128xf32>
    tpu.vector_store %arg3[%c0_18, %c0_19, %c0_20], %65 {strides = array<i32>} : memref<1x1x128xf32, #tpu.memory_space<vmem>>, vector<1x1x128xf32>,
    return
  }
  func.func @transform_0(%arg0: i32) -> (i32, i32) {
    %c0_i32 = arith.constant 0 : i32
    %c0_i32_0 = arith.constant 0 : i32
    return %arg0, %c0_i32 : i32, i32
  }
  func.func @transform_1(%arg0: i32) -> (i32, i32) {
    %c0_i32 = arith.constant 0 : i32
    %c0_i32_0 = arith.constant 0 : i32
    return %arg0, %c0_i32 : i32, i32
  }
  func.func @transform_2(%arg0: i32) -> (i32, i32, i32) {
    %c0_i32 = arith.constant 0 : i32
    %c0_i32_0 = arith.constant 0 : i32
    %c0_i32_1 = arith.constant 0 : i32
    return %arg0, %c0_i32, %c0_i32_0 : i32, i32, i32
  }
}

</mosaic_0001>

<llo_original>
// kernel: tpu_custom_call.1
$region0: #{tpu_custom_call.1}
  #allocation0 [shape = 'u32[]', space=smem, size = 0x4, offset = 0x4, fixed_abs, tag = 'smem constant byte address 0x4 - core index']
  #allocation1 [shape = 'u32[72,128]{1,0:T(1,128)}', space=vmem, size = 0x9000, scoped, tag = 'internal scratch']
  %s0 = inlined_call_operand.vmem [shape: f32[8,32], index: 0, kind: input, shape index: {}]
  %s1 = inlined_call_operand.vmem [shape: s32[8,1], index: 1, kind: input, shape index: {}]
  %s2 = inlined_call_operand.hbm [shape: f32[1,1,128], index: 2, kind: output, shape index: {}]
  %s3 = sld [smem:[#allocation0]]
  $region18: #{tpu_custom_call.1} parent=0
    _
  %s5 = ssub.s32 1, %s3
  %s6 = scalar_select 0, %s5, %s3
  $region1: #{tpu_custom_call.1} parent=0
    #allocation2 [shape = 'u8[512]{0}', space=vmem, size = 0x400, scoped, tag = 'output window, operand 0, single buffered']
    #allocation3 [shape = 's32[1]{0}', space=sflag, size = 0x4, scoped, tag = 'scoped memory for tpu_custom_call.1']
    %7 = vsyncpa [#allocation3], 0
    // Predicated region
    $region2: #{tpu_custom_call.1} parent=1 // pred_check
      _
    $region3: #{tpu_custom_call.1} parent=1 // pred_check_branch
      %9 = sbr.rel (0) target = $region5
    $region4: #{tpu_custom_call.1} parent=1 // pred_region
      _
    $region5: #{tpu_custom_call.1} parent=1 // pred_fallthru
      _
    // Predicated region
    $region6: #{tpu_custom_call.1} parent=1 // pred_check
      _
    $region7: #{tpu_custom_call.1} parent=1 // pred_check_branch
      %11 = sbr.rel (0) target = $region9
    $region8: #{tpu_custom_call.1} parent=1 // pred_region
      _
    $region9: #{tpu_custom_call.1} parent=1 // pred_fallthru
      _
    %v12 = vld [vmem:[%s0] sm:$0xff]
    %v13 = vld [vmem:[%s1] sm:$0xff]
    %v14 = vlaneseq
    %v15 = vshrl.u32 %v14, 7
    %s16 = smul.u32 0, 8
    %v17 = vstv %s16
    %v18 = vadd.s32 %v17, %v15
    %vm19 = vcmp.lt.s32.totalorder %v18, 8
    %v20 = vsel %vm19, %v13, 0
    %vm21 = vcmask 261120
    %v22 = vsel %vm21, %v12, -inf
    %23 = vmax.xlane.f32.xlu0 %v22
    %v24 = vpop.xlane.xlu0 %23
    %v25 = vsub.f32 %v12, %v24
    %v26 = vmul.f32 %v25, 1.442695
    %v27 = vpow.pop %v26
    %v28 = vsel %vm21, %v27, 0.0
    %29 = vadd.xlane.f32.xlu0 %v28
    %v30 = vpop.xlane.xlu0 %29
    %v31 = vlog2.pop %v30
    %v32 = vmul.f32 %v31, 0.6931472
    %v33 = vlaneseq
    %v34 = vand.u32 %v33, 127
    %35 = vset.pattern.permute.xlu0 0
    %36 = vperm.xlu0 %35, %v20
    %v37 = vpop.permute.xlu0 %36
    %vm38 = vcmp.eq.s32.totalorder %v34, %v37
    %v39 = vsel %vm38, %v12, 0.0
    %v40 = vsel %vm21, %v39, 0.0
    %41 = vadd.xlane.f32.xlu0 %v40
    %v42 = vpop.xlane.xlu0 %41
    %v43 = vsub.f32 %v42, %v24
    %v44 = vsub.f32 %v43, %v32
    %v45 = vsub.f32 0.0, %v44
    %v46 = vmul.f32 %v44, 1.442695
    %v47 = vpow.pop %v46
    %v48 = vsub.f32 1.0, %v47
    %v49 = vmax.f32 %v48, 0.0
    %v50 = vmul.f32 %v49, %v49
    %v51 = vmul.f32 %v50, %v45
    %v52 = vcvt.s32.f32 %v20
    %v53 = vmul.f32 %v52, 0.9
    %v54 = vadd.f32 %v53, 0.003125
    %v55 = vlog2.pop %v54
    %v56 = vmul.f32 %v55, 0.6931472
    %v57 = vsub.f32 %v56, %v44
    %v58 = vmul.f32 %v54, %v57
    %v59 = vsel %vm19, %v51, 0.0
    %v60 = vsel %vm19, %v58, 0.0
    %vm61 = vcmask 7168
    %v62 = vsel %vm61, %v59, 0.0
    %63 = vadd.xlane.f32.xlu0 %v62
    %v64 = vpop.xlane.xlu0 %63
    %v65 = vrot.slane %v64, 4
    %v66 = vadd.f32 %v64, %v65
    %v67 = vrot.slane %v66, 2
    %v68 = vadd.f32 %v66, %v67
    %v69 = vrot.slane %v68, 1
    %v70 = vadd.f32 %v68, %v69
    %s71 = vtos %v70
    %v72 = vsel %vm61, %v60, 0.0
    %73 = vadd.xlane.f32.xlu0 %v72
    %v74 = vpop.xlane.xlu0 %73
    %v75 = vrot.slane %v74, 4
    %v76 = vadd.f32 %v74, %v75
    %v77 = vrot.slane %v76, 2
    %v78 = vadd.f32 %v76, %v77
    %v79 = vrot.slane %v78, 1
    %v80 = vadd.f32 %v78, %v79
    %s81 = vtos %v80
    %vm82 = vcmp.eq.s32.totalorder %v34, 0
    %vm83 = vcmp.eq.s32.totalorder %v34, 1
    %v84 = vstv %s81
    %v85 = vsel %vm83, %v84, 0.0
    %v86 = vstv %s71
    %v87 = vsel %vm82, %v86, %v85
    %88 = vst [vmem:[#allocation2] sm:$0x1] %v87
    // Predicated region
    $region10: #{tpu_custom_call.1} parent=1 // pred_check
      _
    $region11: #{tpu_custom_call.1} parent=1 // pred_check_branch
      %90 = sbr.rel (0) target = $region13
    $region12: #{tpu_custom_call.1} parent=1 // pred_region
      %92 = vsyncadd [#allocation3], 0
      %s94 = sshll.u32 [#allocation2], 4
      %s95 = int_to_ptr.vmem [resolvable:$true] %s94
      %s96 = sshll.u32 %s2, 4
      %s97 = int_to_ptr.hbm [resolvable:$true] %s96
      %99 = dma.vmem_to_hbm [thread:$0]  %s95, 16, %s97, [#allocation3]
    $region13: #{tpu_custom_call.1} parent=1 // pred_fallthru
      _
    // Predicated region
    $region14: #{tpu_custom_call.1} parent=1 // pred_check
      _
    $region15: #{tpu_custom_call.1} parent=1 // pred_check_branch
      %101 = sbr.rel (0) target = $region17
    $region16: #{tpu_custom_call.1} parent=1 // pred_region
      %103 = dma.done [#allocation3], 16
    $region17: #{tpu_custom_call.1} parent=1 // pred_fallthru
      _
    %104 = vsyncpa [#allocation3], 1

</llo_original>
